<compile_context>
chip_gen: v7x
topology: tpu7x:2x2x1
jax: 0.10.0
libtpu: 0.0.40
codegen_flags: <defaults>
</compile_context>

<pallas_src>
import jax
import jax.numpy as jnp
from jax import lax
from jax.experimental import pallas as pl
from jax.experimental.pallas import tpu as pltpu


def _round_up(x, m):
    return (x + m - 1) // m * m


# ---------------------------------------------------------------------------
# Pallas kernel: fused one-hot gather of [xyz | features] + center subtraction.
# ---------------------------------------------------------------------------
def _make_kernel(num_feat: int, use_xyz: bool):
    def kernel(idx_ref, src_ref, ctr_ref, out_ref, acc_ref):
        # idx_ref : (1, TM)        int32   gather indices for this PS tile
        # src_ref : (3+C, TN)      bf16/f32  [x,y,z,feat_0..C-1] rows, N-tile cols
        # ctr_ref : (3, TM)        f32     query centers per output column
        # out_ref : (rows_out, TM) f32
        # acc_ref : (3+C, TM)      f32     accumulator across N tiles (scratch)
        k = pl.program_id(2)

        @pl.when(k == 0)
        def _init():
            acc_ref[...] = jnp.zeros_like(acc_ref)

        tn = src_ref.shape[-1]
        tm = idx_ref.shape[-1]
        # One-hot gather tile: rows = global point ids covered by this N tile.
        row_ids = lax.broadcasted_iota(jnp.int32, (tn, tm), 0) + k * tn
        onehot = (row_ids == idx_ref[...]).astype(src_ref.dtype)          # (TN, TM)
        # Fused gather of xyz + features in one MXU pass; exact sum across N tiles
        # (each column has exactly one nonzero over the whole N axis).
        acc_ref[...] += jnp.dot(src_ref[...], onehot,
                                preferred_element_type=jnp.float32)       # (3+C, TM)

        @pl.when(k == pl.num_programs(2) - 1)
        def _finalize():
            if use_xyz:
                raw = acc_ref[0:3, :]                    # raw grouped xyz
                out_ref[0:3, :] = raw
                out_ref[3:6, :] = raw - ctr_ref[...]     # centered grouped xyz
                if num_feat > 0:
                    out_ref[6:, :] = acc_ref[3:, :]      # grouped features
            else:
                out_ref[...] = acc_ref[3:, :]

    return kernel


# ---------------------------------------------------------------------------
# Ball query (JAX replacement of the CUDA wrapper) — no (B,P,nsample,N) tensor.
# ---------------------------------------------------------------------------
def ball_query(radius, nsample, xyz, new_xyz, fps_idx):
    """xyz: (B,N,3), new_xyz: (B,P,3), fps_idx: (B,P) int32.
    Returns (B, P, nsample+1) int32 with fps_idx prepended (RSCNN BallQuery)."""
    B, N, _ = xyz.shape
    d2 = jnp.sum((new_xyz[:, :, None, :] - xyz[:, None, :, :]) ** 2, axis=-1)  # (B,P,N)
    pt_ids = jnp.arange(N, dtype=jnp.int32)
    within = (d2 < radius * radius) & (pt_ids[None, None, :] != fps_idx[:, :, None])
    cum = jnp.cumsum(within.astype(jnp.int32), axis=-1)                        # (B,P,N)
    num_valid = cum[..., -1]                                                   # (B,P)
    targets = jnp.arange(1, nsample + 1, dtype=jnp.int32)                      # (nsample,)
    # index of the (k+1)-th valid point = first j with cum[j] >= k+1
    j_k = jax.vmap(jax.vmap(
        lambda c: jnp.searchsorted(c, targets, side="left")))(cum).astype(jnp.int32)
    first_valid = jnp.where(num_valid > 0, j_k[..., 0], 0).astype(jnp.int32)
    ks = jnp.arange(nsample, dtype=jnp.int32)
    idx = jnp.where(ks[None, None, :] < num_valid[:, :, None],
                    j_k, first_valid[:, :, None])
    return jnp.concatenate([fps_idx[:, :, None].astype(jnp.int32), idx], axis=2)


# ---------------------------------------------------------------------------
# Wrapper: layout prep + pallas_call.
# ---------------------------------------------------------------------------
def query_and_group(xyz, new_xyz, features=None, fps_idx=None, *, radius, nsample,
                    use_xyz=True, tile_ps=512, tile_n=512,
                    compute_dtype=jnp.bfloat16):
    """QueryAndGroup.forward.  Returns (B, 6+C, npoint, nsample+1) (use_xyz + features),
    (B, 6, npoint, nsample+1) (no features) or (B, C, npoint, nsample+1) (no xyz)."""
    B, N, _ = xyz.shape
    P = new_xyz.shape[1]
    S = nsample + 1
    PS = P * S
    C = 0 if features is None else features.shape[1]
    assert use_xyz or features is not None, \
        "Cannot have not features and not use xyz as a feature!"

    idx = ball_query(radius, nsample, xyz, new_xyz, fps_idx)                   # (B,P,S)

    # Channel-major gather source rows: [x, y, z, feat_0..C-1] over the N points.
    xyz_t = jnp.transpose(xyz, (0, 2, 1)).astype(compute_dtype)                # (B,3,N)
    if C > 0:
        src = jnp.concatenate([xyz_t, features.astype(compute_dtype)], axis=1)  # (B,3+C,N)
    else:
        src = xyz_t

    # Lane-dense tiles (multiples of 128); pad PS / N up to tile multiples.
    tm = max(128, min(_round_up(tile_ps, 128), _round_up(PS, 128)))
    tn = max(128, min(_round_up(tile_n, 128), _round_up(N, 128)))
    ps_pad = _round_up(PS, tm)
    n_pad = _round_up(N, tn)

    idx_cols = jnp.pad(idx.reshape(B, 1, PS).astype(jnp.int32),
                       ((0, 0), (0, 0), (0, ps_pad - PS)))                     # (B,1,ps_pad)
    src = jnp.pad(src, ((0, 0), (0, 0), (0, n_pad - N)))                       # (B,3+C,n_pad)
    ctr_t = jnp.transpose(new_xyz, (0, 2, 1)).astype(jnp.float32)              # (B,3,P)
    ctr_cols = jnp.pad(jnp.repeat(ctr_t, S, axis=2),
                       ((0, 0), (0, 0), (0, ps_pad - PS)))                     # (B,3,ps_pad)

    if use_xyz and C > 0:
        rows_out = 6 + C
    elif use_xyz:
        rows_out = 6
    else:
        rows_out = C

    grid = (B, ps_pad // tm, n_pad // tn)
    out = pl.pallas_call(
        _make_kernel(C, use_xyz),
        out_shape=jax.ShapeDtypeStruct((B, rows_out, ps_pad), jnp.float32),
        grid=grid,
        in_specs=[
            pl.BlockSpec((None, 1, tm), lambda b, i, k: (b, 0, i)),       # idx
            pl.BlockSpec((None, 3 + C, tn), lambda b, i, k: (b, 0, k)),   # src (i-invariant)
            pl.BlockSpec((None, 3, tm), lambda b, i, k: (b, 0, i)),       # centers
        ],
        out_specs=pl.BlockSpec((None, rows_out, tm), lambda b, i, k: (b, 0, i)),
        scratch_shapes=[pltpu.VMEM((3 + C, tm), jnp.float32)],
        compiler_params=pltpu.CompilerParams(
            dimension_semantics=("parallel", "parallel", "arbitrary"),
            vmem_limit_bytes=32 * 1024 * 1024,
        ),
    )(idx_cols, src, ctr_cols)

    return out[:, :, :PS].reshape(B, rows_out, P, S)


# ---------------------------------------------------------------------------
# Pure-JAX reference (mirrors the PyTorch forward) for correctness checking.
# ---------------------------------------------------------------------------
def _reference(xyz, new_xyz, features, fps_idx, radius, nsample, use_xyz=True):
    idx = ball_query(radius, nsample, xyz, new_xyz, fps_idx)                   # (B,P,S)
    gather = jax.vmap(lambda f, i: f[:, i])
    xyz_t = jnp.transpose(xyz, (0, 2, 1))                                      # (B,3,N)
    grouped_xyz = gather(xyz_t, idx)                                           # (B,3,P,S)
    rel = grouped_xyz - jnp.transpose(new_xyz, (0, 2, 1))[..., None]
    parts = []
    if use_xyz:
        parts += [grouped_xyz, rel]
    if features is not None:
        parts.append(gather(features, idx))
    return jnp.concatenate(parts, axis=1)


if __name__ == "__main__":
    key = jax.random.PRNGKey(0)
    B, N, P, C = 2, 16, 8, 4
    radius, nsample = 0.6, 8

    k1, k2 = jax.random.split(key)
    # Round inputs to bf16-representable values: the one-hot MXU gather (0/1 weights,
    # f32 accumulation) is then exact regardless of matmul precision mode, which
    # allows a tight correctness tolerance instead of the previous loose 2e-2.
    xyz = jax.random.uniform(k1, (B, N, 3), dtype=jnp.float32)
    xyz = xyz.astype(jnp.bfloat16).astype(jnp.float32)                          # (B,N,3)
    features = jax.random.normal(k2, (B, C, N), dtype=jnp.float32)
    features = features.astype(jnp.bfloat16).astype(jnp.float32)                # (B,C,N)
    # Deterministic stand-in for furthest-point-sampling indices.
    fps_idx = jnp.tile(jnp.arange(P, dtype=jnp.int32)[None, :], (B, 1))         # (B,P)
    new_xyz = jax.vmap(lambda x, i: x[i])(xyz, fps_idx)                         # (B,P,3)

    out = query_and_group(xyz, new_xyz, features, fps_idx,
                          radius=radius, nsample=nsample, use_xyz=True)
    out = jax.block_until_ready(out)
    assert out.shape == (B, 3 + 3 + C, P, nsample + 1), out.shape

    ref = jax.block_until_ready(_reference(xyz, new_xyz, features, fps_idx,
                                           radius, nsample))
    max_err = float(jnp.max(jnp.abs(out - ref)))
    assert max_err < 1e-6, f"max abs error {max_err}"

    print("KERNEL_OK")
</pallas_src>

<mosaic_0001>
module attributes {stable_mosaic.version = 11 : i64} {
  func.func @kernel(%arg0: i32, %arg1: i32, %arg2: i32, %arg3: memref<1x1x128xi32, #tpu.memory_space<vmem>>, %arg4: memref<1x7x128xbf16, #tpu.memory_space<vmem>>, %arg5: memref<1x3x128xf32, #tpu.memory_space<vmem>>, %arg6: memref<1x10x128xf32, #tpu.memory_space<vmem>>, %arg7: memref<7x128xf32, #tpu.memory_space<vmem>>) attributes {dimension_semantics = [#tpu.dimension_semantics<parallel>, #tpu.dimension_semantics<parallel>, #tpu.dimension_semantics<arbitrary>], iteration_bounds = array<i64: 2, 1, 1>, scalar_prefetch = 0 : i64, scratch_operands = 1 : i64, tpu.core_type = #tpu.core_type<tc>, window_params = [{transform_indices = @transform_0, window_bounds = array<i64: 1, 1, 128>}, {transform_indices = @transform_1, window_bounds = array<i64: 1, 7, 128>}, {transform_indices = @transform_2, window_bounds = array<i64: 1, 3, 128>}, {transform_indices = @transform_3, window_bounds = array<i64: 1, 10, 128>}]} {
    %c0_i32 = arith.constant 0 : i32
    %0 = arith.cmpi eq, %arg2, %c0_i32 : i32
    %1 = arith.extui %0 : i1 to i32
    %c0_i32_0 = arith.constant 0 : i32
    %2 = arith.cmpi ne, %1, %c0_i32_0 : i32
    scf.if %2 {
      %cst_12 = arith.constant 0.000000e+00 : f32
      %23 = vector.broadcast %cst_12 : f32 to vector<7x128xf32>
      %c0_13 = arith.constant 0 : index
      %c0_14 = arith.constant 0 : index
      %24 = vector.load %arg7[%c0_13, %c0_14] : memref<7x128xf32, #tpu.memory_space<vmem>>, vector<7x128xf32>
      tpu.vector_store %arg7[%c0_13, %c0_14], %23 {strides = array<i32>} : memref<7x128xf32, #tpu.memory_space<vmem>>, vector<7x128xf32>,
    } else {
    }
    %3 = tpu.iota {dimensions = array<i32: 0>} : vector<128x128xi32>
    %c128_i32 = arith.constant 128 : i32
    %4 = arith.muli %arg2, %c128_i32 : i32
    %5 = vector.broadcast %4 : i32 to vector<128x128xi32>
    %6 = arith.addi %3, %5 : vector<128x128xi32>
    %c0 = arith.constant 0 : index
    %c0_1 = arith.constant 0 : index
    %c0_2 = arith.constant 0 : index
    %7 = vector.load %arg3[%c0, %c0_1, %c0_2] : memref<1x1x128xi32, #tpu.memory_space<vmem>>, vector<1x1x128xi32>
    %8 = vector.shape_cast %7 : vector<1x1x128xi32> to vector<1x128xi32>
    %9 = vector.broadcast %8 : vector<1x128xi32> to vector<128x128xi32>
    %10 = arith.cmpi eq, %6, %9 : vector<128x128xi32>
    %11 = arith.extui %10 : vector<128x128xi1> to vector<128x128xi32>
    %12 = arith.sitofp %11 : vector<128x128xi32> to vector<128x128xf32>
    %13 = arith.truncf %12 : vector<128x128xf32> to vector<128x128xbf16>
    %c0_3 = arith.constant 0 : index
    %c0_4 = arith.constant 0 : index
    %14 = vector.load %arg7[%c0_3, %c0_4] : memref<7x128xf32, #tpu.memory_space<vmem>>, vector<7x128xf32>
    %c0_5 = arith.constant 0 : index
    %c0_6 = arith.constant 0 : index
    %c0_7 = arith.constant 0 : index
    %15 = vector.load %arg4[%c0_5, %c0_6, %c0_7] : memref<1x7x128xbf16, #tpu.memory_space<vmem>>, vector<1x7x128xbf16>
    %16 = vector.shape_cast %15 : vector<1x7x128xbf16> to vector<7x128xbf16>
    %cst = arith.constant dense<0.000000e+00> : vector<7x128xf32>
    %17 = tpu.matmul %16, %13, %cst {dimension_numbers = #tpu.dot_dimension_numbers<[1], [0], [0], [1], [0, 0, 1, 1], [], []>} : vector<7x128xbf16>, vector<128x128xbf16>, vector<7x128xf32> -> vector<7x128xf32>
    %18 = arith.addf %14, %17 : vector<7x128xf32>
    %c0_8 = arith.constant 0 : index
    %c0_9 = arith.constant 0 : index
    %19 = vector.load %arg7[%c0_8, %c0_9] : memref<7x128xf32, #tpu.memory_space<vmem>>, vector<7x128xf32>
    tpu.vector_store %arg7[%c0_8, %c0_9], %18 {strides = array<i32>} : memref<7x128xf32, #tpu.memory_space<vmem>>, vector<7x128xf32>,
    %c0_i32_10 = arith.constant 0 : i32
    %20 = arith.cmpi eq, %arg2, %c0_i32_10 : i32
    %21 = arith.extui %20 : i1 to i32
    %c0_i32_11 = arith.constant 0 : i32
    %22 = arith.cmpi ne, %21, %c0_i32_11 : i32
    scf.if %22 {
      %c0_12 = arith.constant 0 : index
      %c0_13 = arith.constant 0 : index
      %23 = vector.load %arg7[%c0_12, %c0_13] : memref<7x128xf32, #tpu.memory_space<vmem>>, vector<3x128xf32>
      %c0_14 = arith.constant 0 : index
      %c0_15 = arith.constant 0 : index
      %c0_16 = arith.constant 0 : index
      %24 = vector.load %arg6[%c0_14, %c0_15, %c0_16] : memref<1x10x128xf32, #tpu.memory_space<vmem>>, vector<1x3x128xf32>
      %25 = vector.shape_cast %24 : vector<1x3x128xf32> to vector<3x128xf32>
      %26 = vector.shape_cast %23 : vector<3x128xf32> to vector<1x3x128xf32>
      tpu.vector_store %arg6[%c0_14, %c0_15, %c0_16], %26 {strides = array<i32>} : memref<1x10x128xf32, #tpu.memory_space<vmem>>, vector<1x3x128xf32>,
      %c0_17 = arith.constant 0 : index
      %c0_18 = arith.constant 0 : index
      %c0_19 = arith.constant 0 : index
      %27 = vector.load %arg5[%c0_17, %c0_18, %c0_19] : memref<1x3x128xf32, #tpu.memory_space<vmem>>, vector<1x3x128xf32>
      %28 = vector.shape_cast %27 : vector<1x3x128xf32> to vector<3x128xf32>
      %29 = arith.subf %23, %28 : vector<3x128xf32>
      %c0_20 = arith.constant 0 : index
      %c3 = arith.constant 3 : index
      %c0_21 = arith.constant 0 : index
      %30 = vector.load %arg6[%c0_20, %c3, %c0_21] : memref<1x10x128xf32, #tpu.memory_space<vmem>>, vector<1x3x128xf32>
      %31 = vector.shape_cast %30 : vector<1x3x128xf32> to vector<3x128xf32>
      %32 = vector.shape_cast %29 : vector<3x128xf32> to vector<1x3x128xf32>
      tpu.vector_store %arg6[%c0_20, %c3, %c0_21], %32 {strides = array<i32>} : memref<1x10x128xf32, #tpu.memory_space<vmem>>, vector<1x3x128xf32>,
      %c3_22 = arith.constant 3 : index
      %c0_23 = arith.constant 0 : index
      %33 = vector.load %arg7[%c3_22, %c0_23] : memref<7x128xf32, #tpu.memory_space<vmem>>, vector<4x128xf32>
      %c0_24 = arith.constant 0 : index
      %c6 = arith.constant 6 : index
      %c0_25 = arith.constant 0 : index
      %34 = vector.load %arg6[%c0_24, %c6, %c0_25] : memref<1x10x128xf32, #tpu.memory_space<vmem>>, vector<1x4x128xf32>
      %35 = vector.shape_cast %34 : vector<1x4x128xf32> to vector<4x128xf32>
      %36 = vector.shape_cast %33 : vector<4x128xf32> to vector<1x4x128xf32>
      tpu.vector_store %arg6[%c0_24, %c6, %c0_25], %36 {strides = array<i32>} : memref<1x10x128xf32, #tpu.memory_space<vmem>>, vector<1x4x128xf32>,
    } else {
    }
    return
  }
  func.func @transform_0(%arg0: i32, %arg1: i32, %arg2: i32) -> (i32, i32, i32) {
    %c0_i32 = arith.constant 0 : i32
    %c0_i32_0 = arith.constant 0 : i32
    return %arg0, %c0_i32, %arg1 : i32, i32, i32
  }
  func.func @transform_1(%arg0: i32, %arg1: i32, %arg2: i32) -> (i32, i32, i32) {
    %c0_i32 = arith.constant 0 : i32
    %c0_i32_0 = arith.constant 0 : i32
    return %arg0, %c0_i32, %arg2 : i32, i32, i32
  }
  func.func @transform_2(%arg0: i32, %arg1: i32, %arg2: i32) -> (i32, i32, i32) {
    %c0_i32 = arith.constant 0 : i32
    %c0_i32_0 = arith.constant 0 : i32
    return %arg0, %c0_i32, %arg1 : i32, i32, i32
  }
  func.func @transform_3(%arg0: i32, %arg1: i32, %arg2: i32) -> (i32, i32, i32) {
    %c0_i32 = arith.constant 0 : i32
    %c0_i32_0 = arith.constant 0 : i32
    return %arg0, %c0_i32, %arg1 : i32, i32, i32
  }
}

</mosaic_0001>

<llo_original>
// kernel: tpu_custom_call.1
$region0: #{tpu_custom_call.1}
  #allocation0 [shape = 'u32[]', space=smem, size = 0x4, offset = 0x4, fixed_abs, tag = 'smem constant byte address 0x4 - core index']
  #allocation1 [shape = 'u32[144,128]{1,0:T(1,128)}', space=vmem, size = 0x12000, scoped, tag = 'internal scratch']
  #allocation2 [shape = 'f32[7,128]{1,0:T(8,128)}', space=vmem, size = 0x1000, scoped, tag = 'scratch operand']
  %s0 = inlined_call_operand.vmem [shape: s32[2,1,128], index: 0, kind: input, shape index: {}]
  %s1 = inlined_call_operand.vmem [shape: bf16[2,7,128], index: 1, kind: input, shape index: {}]
  %s2 = inlined_call_operand.vmem [shape: f32[2,3,128], index: 2, kind: input, shape index: {}]
  %s3 = inlined_call_operand.vmem [shape: f32[2,10,128], index: 3, kind: output, shape index: {}]
  %s4 = sld [smem:[#allocation0]]
  $region53: #{tpu_custom_call.1} parent=0
    _
  %s6 = ssub.s32 1, %s4
  %s7 = scalar_select 0, %s6, %s4
  loop: start=0, step=1, limit=4
  $region2: #{tpu_custom_call.1} parent=0 // loop_pre_header
    _
  $region3: #{tpu_custom_call.1} parent=0 // loop_header
    %s9 = sphi 0, %s13
    %p10 = scmp.ge.s32.totalorder %s9, 4
    %s16 = sphi 0, %s35
    %s17 = sphi 0, %s31
    %s18 = sphi 0, %s27
    %s19 = sphi 0, %s16
    %s20 = sphi 0, %s17
    %s21 = sphi 0, %s18
    %s22 = sphi 0, %s19
    %s23 = sphi 0, %s20
    %s24 = sphi 0, %s21
    %s40 = sphi 0, %s42
    %s43 = sphi 0, %s40
    %s44 = sphi 0, %s43
    %s60 = sphi 0, %s44
    %s68 = sphi 0, %s70
    %s71 = sphi 0, %s68
    %s72 = sphi 0, %s71
    %s88 = sphi 0, %s72
    %s96 = sphi 0, %s98
    %s99 = sphi 0, %s96
    %s100 = sphi 0, %s99
    %s116 = sphi 0, %s100
    %s124 = sphi 0, %s126
    %s127 = sphi 0, %s124
    %s128 = sphi 0, %s127
    %s144 = sphi 0, %s128
  $region4: #{tpu_custom_call.1} parent=0 // loop_header_branch
    %12 = sbr.rel (%p10) target = $region8
  $region5: #{tpu_custom_call.1} parent=0 // loop_body
    %s14 = ssub.s32 %s9, 1
    %s15 = ssub.s32 %s9, 2
    %s25 = sadd.s32 1, %s18
    %p26 = scmp.ge.s32.totalorder %s25, 1
    %s27 = scalar_select %p26, 0, %s25
    %s28 = sadd.s32 1, %s17
    %s29 = scalar_select %p26, %s28, %s17
    %p30 = scmp.ge.s32.totalorder %s29, 1
    %s31 = scalar_select %p30, 0, %s29
    %s32 = sadd.s32 1, %s16
    %s33 = scalar_select %p30, %s32, %s16
    %p34 = scmp.ge.s32.totalorder %s33, 2
    %s35 = scalar_select %p34, 0, %s33
    %s36 = ssub.s32 %s16, %s35
    %s37 = ssub.s32 %s17, %s31
    %s38 = sor.u32 %s36, %s37
    %p39 = scmp.eq.s32.totalorder %s38, 0
    %s41 = sadd.s32 %s40, 1
    %s42 = scalar_select %p39, %s40, %s41
    %p45 = pneg %p39
    %p46 = scmp.eq.s32.totalorder %s9, 1
    %p47 = por %p45, %p46
    %p48 = scmp.ne.s32.totalorder %s40, %s43
    %p49 = scmp.eq.s32.totalorder %s9, 0
    %p50 = por %p48, %p49
    %p51 = scmp.ne.s32.totalorder %s40, %s43
    %p52 = scmp.eq.s32.totalorder %s14, 1
    %p53 = por %p51, %p52
    %p54 = scmp.ne.s32.totalorder %s43, %s44
    %p55 = scmp.eq.s32.totalorder %s14, 0
    %p56 = por %p54, %p55
    %p57 = scmp.ne.s32.totalorder %s43, %s44
    %p58 = scmp.eq.s32.totalorder %s15, 1
    %p59 = por %p57, %p58
    %p61 = scmp.ne.s32.totalorder %s44, %s60
    %p62 = scmp.eq.s32.totalorder %s15, 0
    %p63 = por %p61, %p62
    %s64 = ssub.s32 %s16, %s35
    %s65 = ssub.s32 %s18, %s27
    %s66 = sor.u32 %s64, %s65
    %p67 = scmp.eq.s32.totalorder %s66, 0
    %s69 = sadd.s32 %s68, 1
    %s70 = scalar_select %p67, %s68, %s69
    %p73 = pneg %p67
    %p74 = scmp.eq.s32.totalorder %s9, 1
    %p75 = por %p73, %p74
    %p76 = scmp.ne.s32.totalorder %s68, %s71
    %p77 = scmp.eq.s32.totalorder %s9, 0
    %p78 = por %p76, %p77
    %p79 = scmp.ne.s32.totalorder %s68, %s71
    %p80 = scmp.eq.s32.totalorder %s14, 1
    %p81 = por %p79, %p80
    %p82 = scmp.ne.s32.totalorder %s71, %s72
    %p83 = scmp.eq.s32.totalorder %s14, 0
    %p84 = por %p82, %p83
    %p85 = scmp.ne.s32.totalorder %s71, %s72
    %p86 = scmp.eq.s32.totalorder %s15, 1
    %p87 = por %p85, %p86
    %p89 = scmp.ne.s32.totalorder %s72, %s88
    %p90 = scmp.eq.s32.totalorder %s15, 0
    %p91 = por %p89, %p90
    %s92 = ssub.s32 %s16, %s35
    %s93 = ssub.s32 %s17, %s31
    %s94 = sor.u32 %s92, %s93
    %p95 = scmp.eq.s32.totalorder %s94, 0
    %s97 = sadd.s32 %s96, 1
    %s98 = scalar_select %p95, %s96, %s97
    %p101 = pneg %p95
    %p102 = scmp.eq.s32.totalorder %s9, 1
    %p103 = por %p101, %p102
    %p104 = scmp.ne.s32.totalorder %s96, %s99
    %p105 = scmp.eq.s32.totalorder %s9, 0
    %p106 = por %p104, %p105
    %p107 = scmp.ne.s32.totalorder %s96, %s99
    %p108 = scmp.eq.s32.totalorder %s14, 1
    %p109 = por %p107, %p108
    %p110 = scmp.ne.s32.totalorder %s99, %s100
    %p111 = scmp.eq.s32.totalorder %s14, 0
    %p112 = por %p110, %p111
    %p113 = scmp.ne.s32.totalorder %s99, %s100
    %p114 = scmp.eq.s32.totalorder %s15, 1
    %p115 = por %p113, %p114
    %p117 = scmp.ne.s32.totalorder %s100, %s116
    %p118 = scmp.eq.s32.totalorder %s15, 0
    %p119 = por %p117, %p118
    %s120 = ssub.s32 %s16, %s35
    %s121 = ssub.s32 %s17, %s31
    %s122 = sor.u32 %s120, %s121
    %p123 = scmp.eq.s32.totalorder %s122, 0
    %s125 = sadd.s32 %s124, 1
    %s126 = scalar_select %p123, %s124, %s125
    %p129 = pneg %p123
    %p130 = scmp.eq.s32.totalorder %s9, 1
    %p131 = por %p129, %p130
    %p132 = scmp.ne.s32.totalorder %s124, %s127
    %p133 = scmp.eq.s32.totalorder %s9, 0
    %p134 = por %p132, %p133
    %p135 = scmp.ne.s32.totalorder %s124, %s127
    %p136 = scmp.eq.s32.totalorder %s14, 1
    %p137 = por %p135, %p136
    %p138 = scmp.ne.s32.totalorder %s127, %s128
    %p139 = scmp.eq.s32.totalorder %s14, 0
    %p140 = por %p138, %p139
    %p141 = scmp.ne.s32.totalorder %s127, %s128
    %p142 = scmp.eq.s32.totalorder %s15, 1
    %p143 = por %p141, %p142
    %p145 = scmp.ne.s32.totalorder %s128, %s144
    %p146 = scmp.eq.s32.totalorder %s15, 0
    %p147 = por %p145, %p146
    %p148 = scmp.le.s32.totalorder 1, %s9
    %p149 = scmp.lt.s32.totalorder %s9, 3
    %p150 = pnand %p148, %p149
    %p151 = pneg %p150
    // Predicated region
    $region9: #{tpu_custom_call.1} parent=5 // pred_check
      _
    $region10: #{tpu_custom_call.1} parent=5 // pred_check_branch
      %153 = sbr.rel (%p150) target = $region12
    $region11: #{tpu_custom_call.1} parent=5 // pred_region
      %s154 = ssub.s32 %s9, 1
    $region12: #{tpu_custom_call.1} parent=5 // pred_fallthru
      _
    %p155 = scmp.lt.s32.totalorder %s9, 2
    // Predicated region
    $region13: #{tpu_custom_call.1} parent=5 // pred_check
      %p156 = pneg %p155
    $region14: #{tpu_custom_call.1} parent=5 // pred_check_branch
      %158 = sbr.rel (%p156) target = $region16
    $region15: #{tpu_custom_call.1} parent=5 // pred_region
      // Predicated region
      $region17: #{tpu_custom_call.1} parent=15 // pred_check
        %p159 = pneg %p50
      $region18: #{tpu_custom_call.1} parent=15 // pred_check_branch
        %161 = sbr.rel (%p159) target = $region20
      $region19: #{tpu_custom_call.1} parent=15 // pred_region
        %p162 = scmp.lt.s32.totalorder %s16, 1
        %s163 = scalar_select %p162, %s16, 1
        %p164 = scmp.lt.s32.totalorder %s17, 0
        %s165 = scalar_select %p164, %s17, 0
        %s166 = sadd.s32 %s165, %s163
        %s167 = scalar_lea.vmem %s0, %s166
      $region20: #{tpu_custom_call.1} parent=15 // pred_fallthru
        _
      // Predicated region
      $region21: #{tpu_custom_call.1} parent=15 // pred_check
        %p168 = pneg %p78
      $region22: #{tpu_custom_call.1} parent=15 // pred_check_branch
        %170 = sbr.rel (%p168) target = $region24
      $region23: #{tpu_custom_call.1} parent=15 // pred_region
        %p171 = scmp.lt.s32.totalorder %s16, 1
        %s172 = scalar_select %p171, %s16, 1
        %p173 = scmp.lt.s32.totalorder %s18, 0
        %s174 = scalar_select %p173, %s18, 0
        %s175 = sadd.s32 %s174, %s172
        %s176 = smul.addr %s175, 4
        %s177 = scalar_lea.vmem %s1, %s176
      $region24: #{tpu_custom_call.1} parent=15 // pred_fallthru
        _
      // Predicated region
      $region25: #{tpu_custom_call.1} parent=15 // pred_check
        %p178 = pneg %p106
      $region26: #{tpu_custom_call.1} parent=15 // pred_check_branch
        %180 = sbr.rel (%p178) target = $region28
      $region27: #{tpu_custom_call.1} parent=15 // pred_region
        %p181 = scmp.lt.s32.totalorder %s16, 1
        %s182 = scalar_select %p181, %s16, 1
        %p183 = scmp.lt.s32.totalorder %s17, 0
        %s184 = scalar_select %p183, %s17, 0
        %s185 = sadd.s32 %s184, %s182
        %s186 = smul.addr %s185, 4
        %s187 = scalar_lea.vmem %s2, %s186
      $region28: #{tpu_custom_call.1} parent=15 // pred_fallthru
        _
    $region16: #{tpu_custom_call.1} parent=5 // pred_fallthru
      _
    %p188 = scmp.le.s32.totalorder 1, %s9
    %p189 = scmp.lt.s32.totalorder %s9, 3
    %p190 = pnand %p188, %p189
    %p191 = pneg %p190
    // Predicated region
    $region29: #{tpu_custom_call.1} parent=5 // pred_check
      _
    $region30: #{tpu_custom_call.1} parent=5 // pred_check_branch
      %193 = sbr.rel (%p190) target = $region32
    $region31: #{tpu_custom_call.1} parent=5 // pred_region
      %s194 = ssub.s32 %s9, 1
      %p195 = scmp.lt.s32.totalorder %s19, 1
      %s196 = scalar_select %p195, %s19, 1
      %p197 = scmp.lt.s32.totalorder %s20, 0
      %s198 = scalar_select %p197, %s20, 0
      %s199 = sadd.s32 %s198, %s196
      %s200 = scalar_lea.vmem %s0, %s199
      %p201 = pneg %p56
      %p202 = pneg %p53
      %p203 = scmp.lt.s32.totalorder %s19, 1
      %s204 = scalar_select %p203, %s19, 1
      %p205 = scmp.lt.s32.totalorder %s21, 0
      %s206 = scalar_select %p205, %s21, 0
      %s207 = sadd.s32 %s206, %s204
      %s208 = smul.addr %s207, 4
      %s209 = scalar_lea.vmem %s1, %s208
      %p210 = pneg %p84
      %p211 = pneg %p81
      %p212 = scmp.lt.s32.totalorder %s19, 1
      %s213 = scalar_select %p212, %s19, 1
      %p214 = scmp.lt.s32.totalorder %s20, 0
      %s215 = scalar_select %p214, %s20, 0
      %s216 = sadd.s32 %s215, %s213
      %s217 = smul.addr %s216, 4
      %s218 = scalar_lea.vmem %s2, %s217
      %p219 = pneg %p112
      %p220 = pneg %p109
      %p221 = pneg %p140
      %p222 = pneg %p137
      %p223 = scmp.lt.s32.totalorder %s19, 1
      %s224 = scalar_select %p223, %s19, 1
      %p225 = scmp.lt.s32.totalorder %s20, 0
      %s226 = scalar_select %p225, %s20, 0
      %s227 = smul.addr %s224, 2
      %s228 = sadd.s32 %s226, %s227
      %s229 = smul.addr %s228, 8
      %s230 = scalar_lea.vmem %s3, %s229
      %p231 = scmp.lt.s32.totalorder %s19, 1
      %s232 = scalar_select %p231, %s19, 1
      %p233 = scmp.lt.s32.totalorder %s20, 0
      %s234 = scalar_select %p233, %s20, 0
      %s235 = sadd.s32 %s234, %s232
      %s236 = scalar_lea.vmem %s0, %s235
      %p237 = scmp.lt.s32.totalorder %s19, 1
      %s238 = scalar_select %p237, %s19, 1
      %p239 = scmp.lt.s32.totalorder %s21, 0
      %s240 = scalar_select %p239, %s21, 0
      %s241 = sadd.s32 %s240, %s238
      %s242 = smul.addr %s241, 4
      %s243 = scalar_lea.vmem %s1, %s242
      %p244 = scmp.lt.s32.totalorder %s19, 1
      %s245 = scalar_select %p244, %s19, 1
      %p246 = scmp.lt.s32.totalorder %s20, 0
      %s247 = scalar_select %p246, %s20, 0
      %s248 = sadd.s32 %s247, %s245
      %s249 = smul.addr %s248, 4
      %s250 = scalar_lea.vmem %s2, %s249
      %p251 = scmp.lt.s32.totalorder %s19, 1
      %s252 = scalar_select %p251, %s19, 1
      %p253 = scmp.lt.s32.totalorder %s20, 0
      %s254 = scalar_select %p253, %s20, 0
      %s255 = smul.addr %s252, 2
      %s256 = sadd.s32 %s254, %s255
      %s257 = smul.addr %s256, 8
      %s258 = scalar_lea.vmem %s3, %s257
      %p260 = scmp.eq.s32.totalorder %s21, 0
      // Predicated region
      $region33: #{tpu_custom_call.1} parent=31 // pred_check
        %p261 = pneg %p260
      $region34: #{tpu_custom_call.1} parent=31 // pred_check_branch
        %263 = sbr.rel (%p261) target = $region36
      $region35: #{tpu_custom_call.1} parent=31 // pred_region
        %264 = vst [vmem:[#allocation2] sm:$0x7f] 0.0
      $region36: #{tpu_custom_call.1} parent=31 // pred_fallthru
        _
      %v265 = vlaneseq
      %v266 = vshrl.u32 %v265, 7
      %v267 = vadd.s32 %v266, 8
      %v268 = vadd.s32 %v266, 16
      %v269 = vadd.s32 %v266, 24
      %v270 = vadd.s32 %v266, 32
      %v271 = vadd.s32 %v266, 40
      %v272 = vadd.s32 %v266, 48
      %v273 = vadd.s32 %v266, 56
      %v274 = vadd.s32 %v266, 64
      %v275 = vadd.s32 %v266, 72
      %v276 = vadd.s32 %v266, 80
      %v277 = vadd.s32 %v266, 88
      %v278 = vadd.s32 %v266, 96
      %v279 = vadd.s32 %v266, 104
      %v280 = vadd.s32 %v266, 112
      %v281 = vadd.s32 %v266, 120
      %s282 = smul.u32 %s21, 128
      %v283 = vstv %s282
      %v284 = vadd.s32 %v266, %v283
      %v285 = vadd.s32 %v267, %v283
      %v286 = vadd.s32 %v268, %v283
      %v287 = vadd.s32 %v269, %v283
      %v288 = vadd.s32 %v270, %v283
      %v289 = vadd.s32 %v271, %v283
      %v290 = vadd.s32 %v272, %v283
      %v291 = vadd.s32 %v273, %v283
      %v292 = vadd.s32 %v274, %v283
      %v293 = vadd.s32 %v275, %v283
      %v294 = vadd.s32 %v276, %v283
      %v295 = vadd.s32 %v277, %v283
      %v296 = vadd.s32 %v278, %v283
      %v297 = vadd.s32 %v279, %v283
      %v298 = vadd.s32 %v280, %v283
      %v299 = vadd.s32 %v281, %v283
      %v300 = vld [vmem:[%s236] sm:$0x1]
      %v301 = vlaneseq
      %v302 = vshrl.u32 %v301, 7
      %v303 = vsub.s32 0, %v302
      %v304 = vrot.slane %v300, %v303
      %vm305 = vcmp.eq.s32.totalorder %v284, %v304
      %vm306 = vcmp.eq.s32.totalorder %v285, %v304
      %vm307 = vcmp.eq.s32.totalorder %v286, %v304
      %vm308 = vcmp.eq.s32.totalorder %v287, %v304
      %vm309 = vcmp.eq.s32.totalorder %v288, %v304
      %vm310 = vcmp.eq.s32.totalorder %v289, %v304
      %vm311 = vcmp.eq.s32.totalorder %v290, %v304
      %vm312 = vcmp.eq.s32.totalorder %v291, %v304
      %vm313 = vcmp.eq.s32.totalorder %v292, %v304
      %vm314 = vcmp.eq.s32.totalorder %v293, %v304
      %vm315 = vcmp.eq.s32.totalorder %v294, %v304
      %vm316 = vcmp.eq.s32.totalorder %v295, %v304
      %vm317 = vcmp.eq.s32.totalorder %v296, %v304
      %vm318 = vcmp.eq.s32.totalorder %v297, %v304
      %vm319 = vcmp.eq.s32.totalorder %v298, %v304
      %vm320 = vcmp.eq.s32.totalorder %v299, %v304
      %v321 = vsel %vm305, 1, 0
      %v322 = vsel %vm306, 1, 0
      %v323 = vsel %vm307, 1, 0
      %v324 = vsel %vm308, 1, 0
      %v325 = vsel %vm309, 1, 0
      %v326 = vsel %vm310, 1, 0
      %v327 = vsel %vm311, 1, 0
      %v328 = vsel %vm312, 1, 0
      %v329 = vsel %vm313, 1, 0
      %v330 = vsel %vm314, 1, 0
      %v331 = vsel %vm315, 1, 0
      %v332 = vsel %vm316, 1, 0
      %v333 = vsel %vm317, 1, 0
      %v334 = vsel %vm318, 1, 0
      %v335 = vsel %vm319, 1, 0
      %v336 = vsel %vm320, 1, 0
      %v337 = vcvt.s32.f32 %v321
      %v338 = vcvt.s32.f32 %v322
      %v339 = vcvt.s32.f32 %v323
      %v340 = vcvt.s32.f32 %v324
      %v341 = vcvt.s32.f32 %v325
      %v342 = vcvt.s32.f32 %v326
      %v343 = vcvt.s32.f32 %v327
      %v344 = vcvt.s32.f32 %v328
      %v345 = vcvt.s32.f32 %v329
      %v346 = vcvt.s32.f32 %v330
      %v347 = vcvt.s32.f32 %v331
      %v348 = vcvt.s32.f32 %v332
      %v349 = vcvt.s32.f32 %v333
      %v350 = vcvt.s32.f32 %v334
      %v351 = vcvt.s32.f32 %v335
      %v352 = vcvt.s32.f32 %v336
      %v353 = vpack.c.bf16 %v338, %v337
      %v354 = vpack.c.bf16 %v340, %v339
      %v355 = vpack.c.bf16 %v342, %v341
      %v356 = vpack.c.bf16 %v344, %v343
      %v357 = vpack.c.bf16 %v346, %v345
      %v358 = vpack.c.bf16 %v348, %v347
      %v359 = vpack.c.bf16 %v350, %v349
      %v360 = vpack.c.bf16 %v352, %v351
      %v361 = vld [vmem:[#allocation2] sm:$0x7f]
      %v362 = vld [vmem:[%s243] sm:$0xf]
      %363 = vmatprep.subr.bf16.mxu0 0
      %364 = vmatpush1.bf16.msra.mxu0 %v353
      %365 = vmatprep.subr.bf16.mxu0 0
      %366 = vmatpush1.bf16.msra.mxu0 %v354
      %367 = vmatprep.subr.bf16.mxu0 0
      %368 = vmatpush1.bf16.msra.mxu0 %v355
      %369 = vmatprep.subr.bf16.mxu0 0
      %370 = vmatpush1.bf16.msra.mxu0 %v356
      %371 = vmatprep.subr.bf16.mxu0 0
      %372 = vmatpush1.bf16.msra.mxu0 %v357
      %373 = vmatprep.subr.bf16.mxu0 0
      %374 = vmatpush1.bf16.msra.mxu0 %v358
      %375 = vmatprep.subr.bf16.mxu0 0
      %376 = vmatpush1.bf16.msra.mxu0 %v359
      %377 = vmatprep.subr.bf16.mxu0 0
      %378 = vmatpush1.bf16.msra.mxu0 %v360
      %379 = vmatprep.subr.bf16.mxu0 0
      %380 = vmatpush1.bf16.msra.mxu0 0
      %381 = vmatprep.subr.bf16.mxu0 0
      %382 = vmatpush1.bf16.msra.mxu0 0
      %383 = vmatprep.subr.bf16.mxu0 0
      %384 = vmatpush1.bf16.msra.mxu0 0
      %385 = vmatprep.subr.bf16.mxu0 0
      %386 = vmatpush1.bf16.msra.mxu0 0
      %387 = vmatprep.subr.bf16.mxu0 0
      %388 = vmatpush1.bf16.msra.mxu0 0
      %389 = vmatprep.subr.bf16.mxu0 0
      %390 = vmatpush1.bf16.msra.mxu0 0
      %391 = vmatprep.subr.bf16.mxu0 0
      %392 = vmatpush1.bf16.msra.mxu0 0
      %393 = vmatprep.subr.bf16.mxu0 0
      %394 = vmatpush1.bf16.msra.mxu0 0
      %395 = vmatprep.mubr.bf16.mxu0 0
      %396 = vmatmul.mubr.bf16.gmra.mrb[0].mxu0 %v362
      %v397 = vpop.f32.mrb[0].mxu0
      %v398 = vadd.f32 0.0, %v397
      %v399 = vpop.f32.mrb[0].mxu0
      %v400 = vpop.f32.mrb[0].mxu0
      %v401 = vpop.f32.mrb[0].mxu0
      %402 = vdwg.mxu0
      %v403 = vadd.f32 %v361, %v398
      %404 = vst [vmem:[#allocation2] sm:$0x7f] %v403
      // Predicated region
      $region37: #{tpu_custom_call.1} parent=31 // pred_check
        %p405 = pneg %p260
      $region38: #{tpu_custom_call.1} parent=31 // pred_check_branch
        %407 = sbr.rel (%p405) target = $region40
      $region39: #{tpu_custom_call.1} parent=31 // pred_region
        %v408 = vld [vmem:[#allocation2] sm:$0x7]
        %409 = vst [vmem:[%s258] sm:$0x7] %v408
        %v410 = vld [vmem:[%s250] sm:$0x7]
        %v411 = vsub.f32 %v408, %v410
        %412 = vst [vmem:[%s258 + $0x3] sm:$0x7] %v411
        %v413 = vld [vmem:[#allocation2 + $0x3] sm:$0xf]
        %414 = vst [vmem:[%s258 + $0x6] sm:$0xf] %v413
      $region40: #{tpu_custom_call.1} parent=31 // pred_fallthru
        _
      %p415 = scmp.lt.s32.totalorder %s19, 1
      %s416 = scalar_select %p415, %s19, 1
      %p417 = scmp.lt.s32.totalorder %s20, 0
      %s418 = scalar_select %p417, %s20, 0
      %s419 = smul.addr %s416, 2
      %s420 = sadd.s32 %s418, %s419
      %s421 = smul.addr %s420, 8
      %s422 = scalar_lea.vmem %s3, %s421
      // Predicated region
      $region41: #{tpu_custom_call.1} parent=31 // pred_check
        %p423 = pneg %p137
      $region42: #{tpu_custom_call.1} parent=31 // pred_check_branch
        %425 = sbr.rel (%p423) target = $region44
      $region43: #{tpu_custom_call.1} parent=31 // pred_region
        _
      $region44: #{tpu_custom_call.1} parent=31 // pred_fallthru
        _
    $region32: #{tpu_custom_call.1} parent=5 // pred_fallthru
      _
    %p426 = scmp.le.s32.totalorder 2, %s9
    // Predicated region
    $region45: #{tpu_custom_call.1} parent=5 // pred_check
      %p427 = pneg %p426
    $region46: #{tpu_custom_call.1} parent=5 // pred_check_branch
      %429 = sbr.rel (%p427) target = $region48
    $region47: #{tpu_custom_call.1} parent=5 // pred_region
      %s430 = ssub.s32 %s9, 2
      // Predicated region
      $region49: #{tpu_custom_call.1} parent=47 // pred_check
        %p431 = pneg %p143
      $region50: #{tpu_custom_call.1} parent=47 // pred_check_branch
        %433 = sbr.rel (%p431) target = $region52
      $region51: #{tpu_custom_call.1} parent=47 // pred_region
        %p434 = scmp.lt.s32.totalorder %s22, 1
        %s435 = scalar_select %p434, %s22, 1
        %p436 = scmp.lt.s32.totalorder %s23, 0
        %s437 = scalar_select %p436, %s23, 0
        %s438 = smul.addr %s435, 2
        %s439 = sadd.s32 %s437, %s438
        %s440 = smul.addr %s439, 8
        %s441 = scalar_lea.vmem %s3, %s440
      $region52: #{tpu_custom_call.1} parent=47 // pred_fallthru
        _
    $region48: #{tpu_custom_call.1} parent=5 // pred_fallthru
      _
  $region6: #{tpu_custom_call.1} parent=0 // loop_footer
    %s13 = sadd.s32 1, %s9
  $region7: #{tpu_custom_call.1} parent=0 // loop_footer_branch
    %8 = sbr.rel target = $region3
  $region8: #{tpu_custom_call.1} parent=0 // loop_exit
    _

</llo_original>
